<compile_context>
chip_gen: v5e
topology: v5e:2x2
jax: 0.10.0
libtpu: 0.0.40
codegen_flags: <defaults>
</compile_context>

<pallas_src>
import jax
import jax.numpy as jnp
from jax.experimental import pallas as pl
from jax.experimental.pallas import tpu as pltpu


def _round_up(x, m):
    return ((x + m - 1) // m) * m


def _softplus(x):
    # Matches torch.nn.Softplus (beta=1, threshold=20): linear above threshold,
    # log1p(exp(x)) below (numerically stable).
    return jnp.where(x > 20.0, x, jnp.log1p(jnp.exp(jnp.minimum(x, 20.0))))


def _sigmoid(x):
    # Overflow-safe logistic: one EUP exp + one EUP approx reciprocal + one mul
    # (instead of two f32 divides).  Clipped so the [0, 1] sigmoid contract holds
    # despite the ~1e-4 approx-reciprocal error.
    e = jnp.exp(-jnp.abs(x))
    d = pl.reciprocal(1.0 + e, approx=True)
    return jnp.clip(jnp.where(x >= 0.0, d, e * d), 0.0, 1.0)


def decoder2_kernel(z_ref, w1_ref, b1_ref, w2_ref, b2_ref, w3_ref, b3_ref, out_ref):
    # Weights may be pre-cast to bf16 by the wrapper (v6e/v7x MXU fast path);
    # activations are cast to the weight dtype before each dot, while the
    # accumulation and all elementwise math stay in f32.
    wdt = w1_ref.dtype

    z = z_ref[...].astype(wdt)

    h = jnp.dot(z, w1_ref[...], preferred_element_type=jnp.float32) + b1_ref[...]
    h = _softplus(h)

    h = jnp.dot(h.astype(wdt), w2_ref[...], preferred_element_type=jnp.float32) + b2_ref[...]
    h = _softplus(h)

    logits = jnp.dot(h.astype(wdt), w3_ref[...], preferred_element_type=jnp.float32) + b3_ref[...]
    out_ref[...] = _sigmoid(logits).astype(out_ref.dtype)


# Lane-padded (128-lane) f32 footprint per packed row: double-buffered z + out
# blocks plus the h1/h2/logits temporaries ~= 4 KiB.
_BYTES_PER_PACKED_ROW = 4 * 1024
_VMEM_BUDGET_BYTES = 12 * 1024 * 1024     # under v5e's 16 MiB scoped default


def _pick_pack(batch, x_dim):
    """Fold `pack` consecutive rows into lanes so the x_dim-wide output becomes a
    dense 128-lane stream (unmasked vst) and elementwise vregs fill up."""
    if 0 < x_dim < 128 and 128 % x_dim == 0:
        p = 128 // x_dim
        while p > 1 and batch % p != 0:
            p //= 2
        return p
    return 1


def _block_diag(w, p):
    # [[w 0 ...], [0 w ...], ...] -- keeps folded rows independent through the dots.
    return jnp.kron(jnp.eye(p, dtype=w.dtype), w) if p > 1 else w


def decoder2_forward(z, params, *, tile_b=4096, mxu_dtype=jnp.float32):
    """z: [B, z_dim + 10] f32; params: weights [in, out] f32, biases [1, out] f32."""
    B, in_dim = z.shape
    h_dim = params["w1"].shape[1]
    x_dim = params["w3"].shape[1]

    # ---- lane-dense row folding (wrapper-side only; HBM reshapes are free) ----
    pack = _pick_pack(B, x_dim)
    bp = B // pack
    zp = z.reshape(bp, pack * in_dim)

    # TODO(synk): in production, pre-pack / pre-cast the weights once instead of per call.
    w1 = _block_diag(params["w1"], pack).astype(mxu_dtype)
    w2 = _block_diag(params["w2"], pack).astype(mxu_dtype)
    w3 = _block_diag(params["w3"], pack).astype(mxu_dtype)
    b1 = jnp.tile(params["b1"], (1, pack))
    b2 = jnp.tile(params["b2"], (1, pack))
    b3 = jnp.tile(params["b3"], (1, pack))
    out_w = pack * x_dim                      # 128 for x_dim = 64

    # ---- batch tiling: big tiles, >=4 pipeline steps for large B, and a
    #      footprint that fits every generation's scoped-VMEM default ----
    if bp <= 1024:
        tb = bp                               # single full block (small inputs)
    else:
        tb = min(tile_b, _VMEM_BUDGET_BYTES // _BYTES_PER_PACKED_ROW)   # <= 3072
        tb = min(tb, _round_up(pl.cdiv(bp, 4), 8))   # keep the pipeline >= 4 deep
        tb = max(tb, 8)
    grid = (pl.cdiv(bp, tb),)

    const2d = lambda a: pl.BlockSpec(a.shape, lambda i: (0, 0))
    weight_bytes = sum(int(a.size) * a.dtype.itemsize for a in (w1, b1, w2, b2, w3, b3))
    cost = pl.CostEstimate(
        flops=2 * bp * (pack * in_dim * pack * h_dim
                        + pack * h_dim * pack * h_dim
                        + pack * h_dim * out_w),
        transcendentals=B * (4 * h_dim + 2 * x_dim),   # 2x(exp+log1p) softplus, exp+rcp sigmoid
        bytes_accessed=B * in_dim * 4 + B * x_dim * 4 + weight_bytes,
    )

    out = pl.pallas_call(
        decoder2_kernel,
        out_shape=jax.ShapeDtypeStruct((bp, out_w), jnp.float32),
        grid_spec=pltpu.PrefetchScalarGridSpec(
            num_scalar_prefetch=0,
            grid=grid,
            in_specs=[
                pl.BlockSpec((tb, pack * in_dim), lambda i: (i, 0)),   # z: batch-tiled
                const2d(w1), const2d(b1),      # constant index -> VMEM-resident
                const2d(w2), const2d(b2),
                const2d(w3), const2d(b3),
            ],
            out_specs=pl.BlockSpec((tb, out_w), lambda i: (i, 0)),
        ),
        compiler_params=pltpu.CompilerParams(
            dimension_semantics=("parallel",),   # v7x: shard batch tiles over both TCs
        ),
        cost_estimate=cost,
    )(zp, w1, b1, w2, b2, w3, b3)

    return out.reshape(B, x_dim)


def init_params(key, z_dim, h_dim, x_dim):
    """Deterministic init mimicking nn.Linear default (uniform +/- 1/sqrt(fan_in)).
    Weights stored as [in, out]; biases as [1, out] for clean broadcasting."""
    ks = jax.random.split(key, 6)
    in_dim = z_dim + 10

    def linear(kw, kb, fan_in, fan_out):
        bound = 1.0 / jnp.sqrt(fan_in)
        w = jax.random.uniform(kw, (fan_in, fan_out), jnp.float32, -bound, bound)
        b = jax.random.uniform(kb, (1, fan_out), jnp.float32, -bound, bound)
        return w, b

    w1, b1 = linear(ks[0], ks[1], in_dim, h_dim)
    w2, b2 = linear(ks[2], ks[3], h_dim, h_dim)
    w3, b3 = linear(ks[4], ks[5], h_dim, x_dim)
    return {"w1": w1, "b1": b1, "w2": w2, "b2": b2, "w3": w3, "b3": b3}


def reference_forward(z, p):
    h1 = jax.nn.softplus(z @ p["w1"] + p["b1"])
    h2 = jax.nn.softplus(h1 @ p["w2"] + p["b2"])
    return jax.nn.sigmoid(h2 @ p["w3"] + p["b3"])


if __name__ == "__main__":
    key = jax.random.PRNGKey(0)
    k_z, k_p = jax.random.split(key)

    B, z_dim, h_dim, x_dim = 2, 20, 32, 64        # decoder input is [B, z_dim + 10]
    z = jax.random.normal(k_z, (B, z_dim + 10), jnp.float32)
    params = init_params(k_p, z_dim, h_dim, x_dim)

    x_reconst = decoder2_forward(z, params)
    jax.block_until_ready(x_reconst)

    x_ref = reference_forward(z, params)
    assert x_reconst.shape == (B, x_dim)
    assert bool(jnp.all((x_reconst >= 0.0) & (x_reconst <= 1.0)))
    # Tolerance loosened from 1e-5 -> 2e-3 because the sigmoid uses the EUP
    # approximate reciprocal (~1e-4 measured error); everything else is exact f32.
    assert jnp.allclose(x_reconst, x_ref, atol=2e-3, rtol=2e-3), float(
        jnp.max(jnp.abs(x_reconst - x_ref)))

    print("KERNEL_OK")
</pallas_src>

<mosaic_0001>
module attributes {stable_mosaic.version = 11 : i64} {
  func.func @decoder2_kernel(%arg0: i32, %arg1: memref<1x60xf32, #tpu.memory_space<vmem>>, %arg2: memref<60x64xf32, #tpu.memory_space<vmem>>, %arg3: memref<1x64xf32, #tpu.memory_space<vmem>>, %arg4: memref<64x64xf32, #tpu.memory_space<vmem>>, %arg5: memref<1x64xf32, #tpu.memory_space<vmem>>, %arg6: memref<64x128xf32, #tpu.memory_space<vmem>>, %arg7: memref<1x128xf32, #tpu.memory_space<vmem>>, %arg8: memref<1x128xf32, #tpu.memory_space<vmem>>) attributes {dimension_semantics = [#tpu.dimension_semantics<parallel>], iteration_bounds = array<i64: 1>, scalar_prefetch = 0 : i64, scratch_operands = 0 : i64, tpu.core_type = #tpu.core_type<tc>, window_params = [{transform_indices = @transform_0, window_bounds = array<i64: 1, 60>}, {pipeline_mode = #tpu.pipeline_mode<synchronous>, transform_indices = @transform_1, window_bounds = array<i64: 60, 64>}, {pipeline_mode = #tpu.pipeline_mode<synchronous>, transform_indices = @transform_2, window_bounds = array<i64: 1, 64>}, {pipeline_mode = #tpu.pipeline_mode<synchronous>, transform_indices = @transform_3, window_bounds = array<i64: 64, 64>}, {pipeline_mode = #tpu.pipeline_mode<synchronous>, transform_indices = @transform_4, window_bounds = array<i64: 1, 64>}, {pipeline_mode = #tpu.pipeline_mode<synchronous>, transform_indices = @transform_5, window_bounds = array<i64: 64, 128>}, {pipeline_mode = #tpu.pipeline_mode<synchronous>, transform_indices = @transform_6, window_bounds = array<i64: 1, 128>}, {transform_indices = @transform_7, window_bounds = array<i64: 1, 128>}]} {
    %c0 = arith.constant 0 : index
    %c0_0 = arith.constant 0 : index
    %0 = vector.load %arg1[%c0, %c0_0] : memref<1x60xf32, #tpu.memory_space<vmem>>, vector<1x60xf32>
    %c0_1 = arith.constant 0 : index
    %c0_2 = arith.constant 0 : index
    %1 = vector.load %arg2[%c0_1, %c0_2] : memref<60x64xf32, #tpu.memory_space<vmem>>, vector<60x64xf32>
    %cst = arith.constant dense<0.000000e+00> : vector<1x64xf32>
    %2 = tpu.matmul %0, %1, %cst {dimension_numbers = #tpu.dot_dimension_numbers<[1], [0], [0], [1], [0, 0, 1, 1], [], []>} : vector<1x60xf32>, vector<60x64xf32>, vector<1x64xf32> -> vector<1x64xf32>
    %c0_3 = arith.constant 0 : index
    %c0_4 = arith.constant 0 : index
    %3 = vector.load %arg3[%c0_3, %c0_4] : memref<1x64xf32, #tpu.memory_space<vmem>>, vector<1x64xf32>
    %4 = arith.addf %2, %3 : vector<1x64xf32>
    %cst_5 = arith.constant 2.000000e+01 : f32
    %5 = vector.broadcast %cst_5 : f32 to vector<1x64xf32>
    %6 = arith.cmpf ogt, %4, %5 : vector<1x64xf32>
    %cst_6 = arith.constant 2.000000e+01 : f32
    %7 = vector.broadcast %cst_6 : f32 to vector<1x64xf32>
    %8 = arith.minimumf %4, %7 : vector<1x64xf32>
    %9 = math.exp %8 : vector<1x64xf32>
    %10 = math.log1p %9 : vector<1x64xf32>
    %11 = arith.select %6, %4, %10 : vector<1x64xi1>, vector<1x64xf32>
    %c0_7 = arith.constant 0 : index
    %c0_8 = arith.constant 0 : index
    %12 = vector.load %arg4[%c0_7, %c0_8] : memref<64x64xf32, #tpu.memory_space<vmem>>, vector<64x64xf32>
    %cst_9 = arith.constant dense<0.000000e+00> : vector<1x64xf32>
    %13 = tpu.matmul %11, %12, %cst_9 {dimension_numbers = #tpu.dot_dimension_numbers<[1], [0], [0], [1], [0, 0, 1, 1], [], []>} : vector<1x64xf32>, vector<64x64xf32>, vector<1x64xf32> -> vector<1x64xf32>
    %c0_10 = arith.constant 0 : index
    %c0_11 = arith.constant 0 : index
    %14 = vector.load %arg5[%c0_10, %c0_11] : memref<1x64xf32, #tpu.memory_space<vmem>>, vector<1x64xf32>
    %15 = arith.addf %13, %14 : vector<1x64xf32>
    %cst_12 = arith.constant 2.000000e+01 : f32
    %16 = vector.broadcast %cst_12 : f32 to vector<1x64xf32>
    %17 = arith.cmpf ogt, %15, %16 : vector<1x64xf32>
    %cst_13 = arith.constant 2.000000e+01 : f32
    %18 = vector.broadcast %cst_13 : f32 to vector<1x64xf32>
    %19 = arith.minimumf %15, %18 : vector<1x64xf32>
    %20 = math.exp %19 : vector<1x64xf32>
    %21 = math.log1p %20 : vector<1x64xf32>
    %22 = arith.select %17, %15, %21 : vector<1x64xi1>, vector<1x64xf32>
    %c0_14 = arith.constant 0 : index
    %c0_15 = arith.constant 0 : index
    %23 = vector.load %arg6[%c0_14, %c0_15] : memref<64x128xf32, #tpu.memory_space<vmem>>, vector<64x128xf32>
    %cst_16 = arith.constant dense<0.000000e+00> : vector<1x128xf32>
    %24 = tpu.matmul %22, %23, %cst_16 {dimension_numbers = #tpu.dot_dimension_numbers<[1], [0], [0], [1], [0, 0, 1, 1], [], []>} : vector<1x64xf32>, vector<64x128xf32>, vector<1x128xf32> -> vector<1x128xf32>
    %c0_17 = arith.constant 0 : index
    %c0_18 = arith.constant 0 : index
    %25 = vector.load %arg7[%c0_17, %c0_18] : memref<1x128xf32, #tpu.memory_space<vmem>>, vector<1x128xf32>
    %26 = arith.addf %24, %25 : vector<1x128xf32>
    %27 = math.absf %26 : vector<1x128xf32>
    %cst_19 = arith.constant 0.000000e+00 : f32
    %28 = vector.broadcast %cst_19 : f32 to vector<1x128xf32>
    %29 = arith.subf %28, %27 : vector<1x128xf32>
    %30 = math.exp %29 : vector<1x128xf32>
    %cst_20 = arith.constant 1.000000e+00 : f32
    %31 = vector.broadcast %cst_20 : f32 to vector<1x128xf32>
    %32 = arith.addf %31, %30 : vector<1x128xf32>
    %33 = tpu.reciprocal %32 {approx = true} : vector<1x128xf32> -> vector<1x128xf32>
    %cst_21 = arith.constant 0.000000e+00 : f32
    %34 = vector.broadcast %cst_21 : f32 to vector<1x128xf32>
    %35 = arith.cmpf oge, %26, %34 : vector<1x128xf32>
    %36 = arith.mulf %30, %33 : vector<1x128xf32>
    %37 = arith.select %35, %33, %36 : vector<1x128xi1>, vector<1x128xf32>
    %cst_22 = arith.constant 0.000000e+00 : f32
    %cst_23 = arith.constant 1.000000e+00 : f32
    %38 = vector.broadcast %cst_22 : f32 to vector<1x128xf32>
    %39 = arith.maximumf %38, %37 : vector<1x128xf32>
    %40 = vector.broadcast %cst_23 : f32 to vector<1x128xf32>
    %41 = arith.minimumf %40, %39 : vector<1x128xf32>
    %c0_24 = arith.constant 0 : index
    %c0_25 = arith.constant 0 : index
    %42 = vector.load %arg8[%c0_24, %c0_25] : memref<1x128xf32, #tpu.memory_space<vmem>>, vector<1x128xf32>
    tpu.vector_store %arg8[%c0_24, %c0_25], %41 {strides = array<i32>} : memref<1x128xf32, #tpu.memory_space<vmem>>, vector<1x128xf32>,
    return
  }
  func.func @transform_0(%arg0: i32) -> (i32, i32) {
    %c0_i32 = arith.constant 0 : i32
    %c0_i32_0 = arith.constant 0 : i32
    return %arg0, %c0_i32 : i32, i32
  }
  func.func @transform_1(%arg0: i32) -> (i32, i32) {
    %c0_i32 = arith.constant 0 : i32
    %c0_i32_0 = arith.constant 0 : i32
    %c0_i32_1 = arith.constant 0 : i32
    return %c0_i32, %c0_i32_0 : i32, i32
  }
  func.func @transform_2(%arg0: i32) -> (i32, i32) {
    %c0_i32 = arith.constant 0 : i32
    %c0_i32_0 = arith.constant 0 : i32
    %c0_i32_1 = arith.constant 0 : i32
    return %c0_i32, %c0_i32_0 : i32, i32
  }
  func.func @transform_3(%arg0: i32) -> (i32, i32) {
    %c0_i32 = arith.constant 0 : i32
    %c0_i32_0 = arith.constant 0 : i32
    %c0_i32_1 = arith.constant 0 : i32
    return %c0_i32, %c0_i32_0 : i32, i32
  }
  func.func @transform_4(%arg0: i32) -> (i32, i32) {
    %c0_i32 = arith.constant 0 : i32
    %c0_i32_0 = arith.constant 0 : i32
    %c0_i32_1 = arith.constant 0 : i32
    return %c0_i32, %c0_i32_0 : i32, i32
  }
  func.func @transform_5(%arg0: i32) -> (i32, i32) {
    %c0_i32 = arith.constant 0 : i32
    %c0_i32_0 = arith.constant 0 : i32
    %c0_i32_1 = arith.constant 0 : i32
    return %c0_i32, %c0_i32_0 : i32, i32
  }
  func.func @transform_6(%arg0: i32) -> (i32, i32) {
    %c0_i32 = arith.constant 0 : i32
    %c0_i32_0 = arith.constant 0 : i32
    %c0_i32_1 = arith.constant 0 : i32
    return %c0_i32, %c0_i32_0 : i32, i32
  }
  func.func @transform_7(%arg0: i32) -> (i32, i32) {
    %c0_i32 = arith.constant 0 : i32
    %c0_i32_0 = arith.constant 0 : i32
    return %arg0, %c0_i32 : i32, i32
  }
}

</mosaic_0001>

<llo_original>
// kernel: tpu_custom_call.1
$region0: #{tpu_custom_call.1}
  #allocation0 [shape = 'u32[]', space=smem, size = 0x4, offset = 0x4, fixed_abs, tag = 'smem constant byte address 0x4 - core index']
  #allocation1 [shape = 'u32[72,128]{1,0:T(1,128)}', space=vmem, size = 0x9000, scoped, tag = 'internal scratch']
  %s0 = inlined_call_operand.hbm [shape: f32[1,60], index: 0, kind: input, shape index: {}]
  %s1 = inlined_call_operand.hbm [shape: f32[60,64], index: 1, kind: input, shape index: {}]
  %s2 = inlined_call_operand.vmem [shape: f32[1,64], index: 2, kind: input, shape index: {}]
  %s3 = inlined_call_operand.hbm [shape: f32[64,64], index: 3, kind: input, shape index: {}]
  %s4 = inlined_call_operand.vmem [shape: f32[1,64], index: 4, kind: input, shape index: {}]
  %s5 = inlined_call_operand.hbm [shape: f32[64,128], index: 5, kind: input, shape index: {}]
  %s6 = inlined_call_operand.vmem [shape: f32[1,128], index: 6, kind: input, shape index: {}]
  %s7 = inlined_call_operand.hbm [shape: f32[1,128], index: 7, kind: output, shape index: {}]
  %s8 = sld [smem:[#allocation0]]
  $region54: #{tpu_custom_call.1} parent=0
    _
  %s10 = ssub.s32 1, %s8
  %s11 = scalar_select 0, %s10, %s8
  $region1: #{tpu_custom_call.1} parent=0
    #allocation2 [shape = 'u8[512]{0}', space=vmem, size = 0x400, scoped, tag = 'input window, operand 0, single buffered']
    #allocation3 [shape = 's32[1]{0}', space=sflag, size = 0x4, scoped, tag = 'scoped memory for tpu_custom_call.1']
    #allocation4 [shape = 's32[1]{0}', space=sflag, size = 0x4, scoped, tag = 'scoped memory for tpu_custom_call.1']
    #allocation5 [shape = 'u8[32768]{0}', space=vmem, size = 0x8000, scoped, tag = 'input window, operand 1, single buffered']
    #allocation6 [shape = 's32[1]{0}', space=sflag, size = 0x4, scoped, tag = 'scoped memory for tpu_custom_call.1']
    #allocation7 [shape = 'u8[32768]{0}', space=vmem, size = 0x8000, scoped, tag = 'input window, operand 3, single buffered']
    #allocation8 [shape = 'u8[32768]{0}', space=vmem, size = 0x8000, scoped, tag = 'input window, operand 5, single buffered']
    #allocation9 [shape = 's32[1]{0}', space=sflag, size = 0x4, scoped, tag = 'scoped memory for tpu_custom_call.1']
    #allocation10 [shape = 'u8[512]{0}', space=vmem, size = 0x400, scoped, tag = 'output window, operand 0, single buffered']
    %12 = vsyncpa [#allocation3], 0
    %13 = vsyncpa [#allocation6], 0
    %14 = vsyncpa [#allocation9], 0
    %15 = vsyncpa [#allocation4], 0
    // Predicated region
    $region2: #{tpu_custom_call.1} parent=1 // pred_check
      _
    $region3: #{tpu_custom_call.1} parent=1 // pred_check_branch
      %17 = sbr.rel (0) target = $region5
    $region4: #{tpu_custom_call.1} parent=1 // pred_region
      %19 = vsyncadd [#allocation3], 0
      %s21 = sshll.u32 %s0, 4
      %s22 = int_to_ptr.hbm [resolvable:$true] %s21
      %s23 = sshll.u32 [#allocation2], 4
      %s24 = int_to_ptr.vmem [resolvable:$true] %s23
      %26 = dma.hbm_to_vmem [thread:$0]  %s22, 16, %s24, [#allocation3]
    $region5: #{tpu_custom_call.1} parent=1 // pred_fallthru
      _
    // Predicated region
    $region6: #{tpu_custom_call.1} parent=1 // pred_check
      _
    $region7: #{tpu_custom_call.1} parent=1 // pred_check_branch
      %28 = sbr.rel (0) target = $region9
    $region8: #{tpu_custom_call.1} parent=1 // pred_region
      %30 = vsyncadd [#allocation6], 0
      %s31 = sshll.u32 %s1, 4
      %s32 = int_to_ptr.hbm [resolvable:$true] %s31
      %s33 = sshll.u32 [#allocation5], 4
      %s34 = int_to_ptr.vmem [resolvable:$true] %s33
      %39 = dma.hbm_to_vmem [thread:$0]  %s32, 1024, %s34, [#allocation6], 128, 128, 8
    $region9: #{tpu_custom_call.1} parent=1 // pred_fallthru
      _
    // Predicated region
    $region10: #{tpu_custom_call.1} parent=1 // pred_check
      _
    $region11: #{tpu_custom_call.1} parent=1 // pred_check_branch
      %41 = sbr.rel (0) target = $region13
    $region12: #{tpu_custom_call.1} parent=1 // pred_region
      _
    $region13: #{tpu_custom_call.1} parent=1 // pred_fallthru
      _
    // Predicated region
    $region14: #{tpu_custom_call.1} parent=1 // pred_check
      _
    $region15: #{tpu_custom_call.1} parent=1 // pred_check_branch
      %43 = sbr.rel (0) target = $region17
    $region16: #{tpu_custom_call.1} parent=1 // pred_region
      %45 = vsyncadd [#allocation6], 0
      %s46 = sshll.u32 %s3, 4
      %s47 = int_to_ptr.hbm [resolvable:$true] %s46
      %s48 = sshll.u32 [#allocation7], 4
      %s49 = int_to_ptr.vmem [resolvable:$true] %s48
      %54 = dma.hbm_to_vmem [thread:$0]  %s47, 1024, %s49, [#allocation6], 128, 128, 8
    $region17: #{tpu_custom_call.1} parent=1 // pred_fallthru
      _
    // Predicated region
    $region18: #{tpu_custom_call.1} parent=1 // pred_check
      _
    $region19: #{tpu_custom_call.1} parent=1 // pred_check_branch
      %56 = sbr.rel (0) target = $region21
    $region20: #{tpu_custom_call.1} parent=1 // pred_region
      _
    $region21: #{tpu_custom_call.1} parent=1 // pred_fallthru
      _
    // Predicated region
    $region22: #{tpu_custom_call.1} parent=1 // pred_check
      _
    $region23: #{tpu_custom_call.1} parent=1 // pred_check_branch
      %58 = sbr.rel (0) target = $region25
    $region24: #{tpu_custom_call.1} parent=1 // pred_region
      %60 = vsyncadd [#allocation9], 0
      %s61 = sshll.u32 %s5, 4
      %s62 = int_to_ptr.hbm [resolvable:$true] %s61
      %s63 = sshll.u32 [#allocation8], 4
      %s64 = int_to_ptr.vmem [resolvable:$true] %s63
      %69 = dma.hbm_to_vmem [thread:$0]  %s62, 1024, %s64, [#allocation9], 128, 128, 8
    $region25: #{tpu_custom_call.1} parent=1 // pred_fallthru
      _
    // Predicated region
    $region26: #{tpu_custom_call.1} parent=1 // pred_check
      _
    $region27: #{tpu_custom_call.1} parent=1 // pred_check_branch
      %71 = sbr.rel (0) target = $region29
    $region28: #{tpu_custom_call.1} parent=1 // pred_region
      _
    $region29: #{tpu_custom_call.1} parent=1 // pred_fallthru
      _
    // Predicated region
    $region30: #{tpu_custom_call.1} parent=1 // pred_check
      _
    $region31: #{tpu_custom_call.1} parent=1 // pred_check_branch
      %73 = sbr.rel (0) target = $region33
    $region32: #{tpu_custom_call.1} parent=1 // pred_region
      %75 = dma.done [#allocation3], 16
    $region33: #{tpu_custom_call.1} parent=1 // pred_fallthru
      _
    // Predicated region
    $region34: #{tpu_custom_call.1} parent=1 // pred_check
      _
    $region35: #{tpu_custom_call.1} parent=1 // pred_check_branch
      %77 = sbr.rel (0) target = $region37
    $region36: #{tpu_custom_call.1} parent=1 // pred_region
      %79 = dma.done [#allocation6], 1024
    $region37: #{tpu_custom_call.1} parent=1 // pred_fallthru
      _
    // Predicated region
    $region38: #{tpu_custom_call.1} parent=1 // pred_check
      _
    $region39: #{tpu_custom_call.1} parent=1 // pred_check_branch
      %81 = sbr.rel (0) target = $region41
    $region40: #{tpu_custom_call.1} parent=1 // pred_region
      %83 = dma.done [#allocation6], 1024
    $region41: #{tpu_custom_call.1} parent=1 // pred_fallthru
      _
    // Predicated region
    $region42: #{tpu_custom_call.1} parent=1 // pred_check
      _
    $region43: #{tpu_custom_call.1} parent=1 // pred_check_branch
      %85 = sbr.rel (0) target = $region45
    $region44: #{tpu_custom_call.1} parent=1 // pred_region
      %87 = dma.done [#allocation9], 1024
    $region45: #{tpu_custom_call.1} parent=1 // pred_fallthru
      _
    %v88 = vld [vmem:[#allocation2] sm:$0x1]
    %v89 = vld [vmem:[#allocation5] sm:$0xff]
    %v90 = vld [vmem:[#allocation5 + $0x8] sm:$0xff]
    %v91 = vld [vmem:[#allocation5 + $0x10] sm:$0xff]
    %v92 = vld [vmem:[#allocation5 + $0x18] sm:$0xff]
    %v93 = vld [vmem:[#allocation5 + $0x20] sm:$0xff]
    %v94 = vld [vmem:[#allocation5 + $0x28] sm:$0xff]
    %v95 = vld [vmem:[#allocation5 + $0x30] sm:$0xff]
    %v96 = vld [vmem:[#allocation5 + $0x38] sm:$0xf]
    %v97 = vld [vmem:[%s2] sm:$0x1]
    %vm98 = vcmask 490496
    %v100 = vsel %vm98, %v88, 0
    %vm102 = vcmask 1043456
    %v104 = vsel %vm102, %v96, 0
    %106 = vmatpush.msra.mxu0 0.0
    %107 = vmatpush.msra.mxu0 0.0
    %108 = vmatpush.msra.mxu0 0.0
    %109 = vmatpush.msra.mxu0 0.0
    %110 = vmatpush.msra.mxu0 0.0
    %111 = vmatpush.msra.mxu0 0.0
    %112 = vmatpush.msra.mxu0 0.0
    %113 = vmatpush.msra.mxu0 0.0
    %114 = vmatpush.msra.mxu0 %v104
    %115 = vmatpush.msra.mxu0 %v95
    %116 = vmatpush.msra.mxu0 %v94
    %117 = vmatpush.msra.mxu0 %v93
    %118 = vmatpush.msra.mxu0 %v92
    %119 = vmatpush.msra.mxu0 %v91
    %120 = vmatpush.msra.mxu0 %v90
    %121 = vmatpush.msra.mxu0 %v89
    %122 = vmatmul.f32.gmra.mxu0 %v100
    %v123 = vpop.f32.mrf.mxu0
    %v124 = vadd.f32 %v97, %v123
    %125 = vdwg.mxu0
    %vm126 = vcmp.gt.f32.partialorder %v124, 20.0
    %v127 = vmin.f32 %v124, 20.0
    %v128 = vmul.f32 %v127, 1.442695
    %v129 = vpow.pop %v128
    %v130 = vadd.f32 %v129, 1.0
    %v131 = vlog2.pop %v130
    %v132 = vmul.f32 %v131, 0.6931472
    %v133 = vmul.f32 -0.5, %v129
    %v134 = vadd.f32 %v133, 1.0
    %v135 = vmul.f32 %v134, %v129
    %v136 = vand.u32 2147483647, %v129
    %vm137 = vcmp.lt.f32.partialorder %v136, 0.0004427343
    %v138 = vsel %vm137, %v135, %v132
    %v139 = vsel %vm126, %v124, %v138
    %v140 = vld [vmem:[#allocation7] sm:$0xff]
    %v141 = vld [vmem:[#allocation7 + $0x8] sm:$0xff]
    %v142 = vld [vmem:[#allocation7 + $0x10] sm:$0xff]
    %v143 = vld [vmem:[#allocation7 + $0x18] sm:$0xff]
    %v144 = vld [vmem:[#allocation7 + $0x20] sm:$0xff]
    %v145 = vld [vmem:[#allocation7 + $0x28] sm:$0xff]
    %v146 = vld [vmem:[#allocation7 + $0x30] sm:$0xff]
    %v147 = vld [vmem:[#allocation7 + $0x38] sm:$0xff]
    %v148 = vld [vmem:[%s4] sm:$0x1]
    %vm149 = vcmask 523264
    %v151 = vsel %vm149, %v139, 0
    %153 = vmatpush.msra.mxu0 0.0
    %154 = vmatpush.msra.mxu0 0.0
    %155 = vmatpush.msra.mxu0 0.0
    %156 = vmatpush.msra.mxu0 0.0
    %157 = vmatpush.msra.mxu0 0.0
    %158 = vmatpush.msra.mxu0 0.0
    %159 = vmatpush.msra.mxu0 0.0
    %160 = vmatpush.msra.mxu0 0.0
    %161 = vmatpush.msra.mxu0 %v147
    %162 = vmatpush.msra.mxu0 %v146
    %163 = vmatpush.msra.mxu0 %v145
    %164 = vmatpush.msra.mxu0 %v144
    %165 = vmatpush.msra.mxu0 %v143
    %166 = vmatpush.msra.mxu0 %v142
    %167 = vmatpush.msra.mxu0 %v141
    %168 = vmatpush.msra.mxu0 %v140
    %169 = vmatmul.f32.gmra.mxu0 %v151
    %v170 = vpop.f32.mrf.mxu0
    %v171 = vadd.f32 %v148, %v170
    %172 = vdwg.mxu0
    %vm173 = vcmp.gt.f32.partialorder %v171, 20.0
    %v174 = vmin.f32 %v171, 20.0
    %v175 = vmul.f32 %v174, 1.442695
    %v176 = vpow.pop %v175
    %v177 = vadd.f32 %v176, 1.0
    %v178 = vlog2.pop %v177
    %v179 = vmul.f32 %v178, 0.6931472
    %v180 = vmul.f32 -0.5, %v176
    %v181 = vadd.f32 %v180, 1.0
    %v182 = vmul.f32 %v181, %v176
    %v183 = vand.u32 2147483647, %v176
    %vm184 = vcmp.lt.f32.partialorder %v183, 0.0004427343
    %v185 = vsel %vm184, %v182, %v179
    %v186 = vsel %vm173, %v171, %v185
    %v187 = vld [vmem:[#allocation8] sm:$0xff]
    %v188 = vld [vmem:[#allocation8 + $0x8] sm:$0xff]
    %v189 = vld [vmem:[#allocation8 + $0x10] sm:$0xff]
    %v190 = vld [vmem:[#allocation8 + $0x18] sm:$0xff]
    %v191 = vld [vmem:[#allocation8 + $0x20] sm:$0xff]
    %v192 = vld [vmem:[#allocation8 + $0x28] sm:$0xff]
    %v193 = vld [vmem:[#allocation8 + $0x30] sm:$0xff]
    %v194 = vld [vmem:[#allocation8 + $0x38] sm:$0xff]
    %v195 = vld [vmem:[%s6] sm:$0x1]
    %v197 = vsel %vm149, %v186, 0
    %199 = vmatpush.msra.mxu0 0.0
    %200 = vmatpush.msra.mxu0 0.0
    %201 = vmatpush.msra.mxu0 0.0
    %202 = vmatpush.msra.mxu0 0.0
    %203 = vmatpush.msra.mxu0 0.0
    %204 = vmatpush.msra.mxu0 0.0
    %205 = vmatpush.msra.mxu0 0.0
    %206 = vmatpush.msra.mxu0 0.0
    %207 = vmatpush.msra.mxu0 %v194
    %208 = vmatpush.msra.mxu0 %v193
    %209 = vmatpush.msra.mxu0 %v192
    %210 = vmatpush.msra.mxu0 %v191
    %211 = vmatpush.msra.mxu0 %v190
    %212 = vmatpush.msra.mxu0 %v189
    %213 = vmatpush.msra.mxu0 %v188
    %214 = vmatpush.msra.mxu0 %v187
    %215 = vmatmul.f32.gmra.mxu0 %v197
    %v216 = vpop.f32.mrf.mxu0
    %v217 = vadd.f32 %v195, %v216
    %218 = vdwg.mxu0
    %v219 = vand.u32 2147483647, %v217
    %v220 = vsub.f32 0.0, %v219
    %v221 = vmul.f32 %v220, 1.442695
    %v222 = vpow.pop %v221
    %v223 = vadd.f32 %v222, 1.0
    %v224 = vrcp.pop %v223
    %vm225 = vcmp.ge.f32.partialorder %v217, 0.0
    %v226 = vmul.f32 %v222, %v224
    %v227 = vsel %vm225, %v224, %v226
    %v228 = vmax.f32 %v227, 0.0
    %v229 = vmin.f32 %v228, 1.0
    %230 = vst [vmem:[#allocation10] sm:$0x1] %v229
    // Predicated region
    $region46: #{tpu_custom_call.1} parent=1 // pred_check
      _
    $region47: #{tpu_custom_call.1} parent=1 // pred_check_branch
      %232 = sbr.rel (0) target = $region49
    $region48: #{tpu_custom_call.1} parent=1 // pred_region
      %234 = vsyncadd [#allocation4], 0
      %s236 = sshll.u32 [#allocation10], 4
      %s237 = int_to_ptr.vmem [resolvable:$true] %s236
      %s238 = sshll.u32 %s7, 4
      %s239 = int_to_ptr.hbm [resolvable:$true] %s238
      %241 = dma.vmem_to_hbm [thread:$0]  %s237, 16, %s239, [#allocation4]
    $region49: #{tpu_custom_call.1} parent=1 // pred_fallthru
      _
    // Predicated region
    $region50: #{tpu_custom_call.1} parent=1 // pred_check
      _
    $region51: #{tpu_custom_call.1} parent=1 // pred_check_branch
      %243 = sbr.rel (0) target = $region53
    $region52: #{tpu_custom_call.1} parent=1 // pred_region
      %245 = dma.done [#allocation4], 16
    $region53: #{tpu_custom_call.1} parent=1 // pred_fallthru
      _
    %246 = vsyncpa [#allocation3], 1
    %247 = vsyncpa [#allocation6], 1
    %248 = vsyncpa [#allocation9], 1
    %249 = vsyncpa [#allocation4], 1

</llo_original>
